<compile_context>
chip_gen: v7x
topology: tpu7x:2x2x1
jax: 0.10.0
libtpu: 0.0.40
codegen_flags: <defaults>
</compile_context>

<pallas_src>
import functools

import jax
import jax.numpy as jnp
from jax import lax
from jax.experimental import pallas as pl
from jax.experimental.pallas import tpu as pltpu


def _round_up(x, m):
    return ((x + m - 1) // m) * m


# ---------------------------------------------------------------------------
# Fast path: in_features == out_features == 1   (x = randn(100, 1), LR(1, 1))
# ---------------------------------------------------------------------------
_SCALAR_COLS = 512          # lane width (multiple of 128) -> unmasked stores
_SCALAR_BLOCK_ROWS = 512    # ~1 MiB f32 per block -> good DMA/compute overlap


def _lr_scalar_kernel(w_ref, b_ref, x_ref, o_ref):
    # w_ref, b_ref: (1, 1) scalars in SMEM.  x_ref/o_ref: lane-dense VMEM block.
    o_ref[...] = x_ref[...] * w_ref[0, 0] + b_ref[0, 0]


def _lr_forward_scalar(x, weight, bias):
    n = x.shape[0]
    cols = _SCALAR_COLS

    rows = max(_round_up(pl.cdiv(n, cols), 8), 8)      # sublane alignment
    block_rows = min(_SCALAR_BLOCK_ROWS, rows)
    rows = _round_up(rows, block_rows)                  # whole number of blocks
    padded = rows * cols
    grid_m = rows // block_rows

    x_flat = x.reshape(-1)
    if padded != n:
        x_flat = jnp.pad(x_flat, (0, padded - n))
    x2d = x_flat.reshape(rows, cols)

    w = weight.reshape(1, 1)
    b = bias.reshape(1, 1)

    out2d = pl.pallas_call(
        _lr_scalar_kernel,
        out_shape=jax.ShapeDtypeStruct((rows, cols), x.dtype),
        grid_spec=pltpu.PrefetchScalarGridSpec(
            num_scalar_prefetch=0,
            grid=(grid_m,),
            in_specs=[
                pl.BlockSpec((1, 1), lambda i: (0, 0),
                             memory_space=pltpu.MemorySpace.SMEM),   # weight
                pl.BlockSpec((1, 1), lambda i: (0, 0),
                             memory_space=pltpu.MemorySpace.SMEM),   # bias
                pl.BlockSpec((block_rows, cols), lambda i: (i, 0)),  # x slab
            ],
            out_specs=pl.BlockSpec((block_rows, cols), lambda i: (i, 0)),
        ),
        compiler_params=pltpu.CompilerParams(
            dimension_semantics=("parallel",),   # row blocks split across TCs
        ),
    )(w, b, x2d)

    # TODO(synk): at N=100 the pad/reshape/slice wrapper ops + launch dominate;
    # a plain fused XLA multiply-add would beat the Pallas launch at this size.
    return out2d.reshape(-1)[:n].reshape(n, 1)


# ---------------------------------------------------------------------------
# General path: tiled MXU matmul (W kept in native layout) + fused bias.
# ---------------------------------------------------------------------------
def _matmul_bias_f32_kernel(x_ref, w_ref, b_ref, o_ref, *, precision):
    """f32 output: accumulate directly into o_ref (resident across k)."""
    k = pl.program_id(2)

    @pl.when(k == 0)
    def _():
        o_ref[...] = jnp.zeros_like(o_ref)

    # x (tm, tk) . W (tn, tk) contracted on the last dims == x @ W.T,
    # so no wrapper-side weight.T / extra HBM round trip of W.
    o_ref[...] += lax.dot_general(
        x_ref[...], w_ref[...],
        dimension_numbers=(((1,), (1,)), ((), ())),
        preferred_element_type=jnp.float32,
        precision=precision,
    )

    @pl.when(k == pl.num_programs(2) - 1)
    def _():
        o_ref[...] += b_ref[...]


def _matmul_bias_scratch_kernel(x_ref, w_ref, b_ref, o_ref, acc_ref, *,
                                precision):
    """Non-f32 output: keep an f32 VMEM accumulator, cast at the end."""
    k = pl.program_id(2)

    @pl.when(k == 0)
    def _():
        acc_ref[...] = jnp.zeros_like(acc_ref)

    acc_ref[...] += lax.dot_general(
        x_ref[...], w_ref[...],
        dimension_numbers=(((1,), (1,)), ((), ())),
        preferred_element_type=jnp.float32,
        precision=precision,
    )

    @pl.when(k == pl.num_programs(2) - 1)
    def _():
        o_ref[...] = (acc_ref[...] + b_ref[...]).astype(o_ref.dtype)


def _lr_forward_general(x, weight, bias, *, tm_cap=512, tn_cap=512, tk_cap=512):
    n, in_f = x.shape
    out_f = weight.shape[0]
    dtype = x.dtype

    # Clamp tiles to the aligned problem so small layers get no padded blow-up.
    # Caps (512) are multiples of 256 to feed the 256x256 MXU on v6e/v7x; a
    # 512-class f32 tiling double-buffered is ~6 MiB, fine on all generations.
    tm = min(tm_cap, _round_up(n, 8))
    tn = out_f if out_f <= tn_cap else tn_cap
    tk = in_f if in_f <= tk_cap else tk_cap

    mp = _round_up(n, tm)
    np_ = _round_up(out_f, tn)
    kp = _round_up(in_f, tk)

    # Pad only when actually needed (no-op for aligned shapes).  K is padded
    # with zeros so the reduction stays exact; M/N pads are sliced off below.
    xp = x if (mp == n and kp == in_f) else jnp.pad(
        x, ((0, mp - n), (0, kp - in_f)))
    wp = weight if (np_ == out_f and kp == in_f) else jnp.pad(
        weight, ((0, np_ - out_f), (0, kp - in_f)))
    b2 = bias.reshape(1, out_f)
    bp = b2 if np_ == out_f else jnp.pad(b2, ((0, 0), (0, np_ - out_f)))

    # f32 parity with PyTorch f32 nn.Linear (default MXU mode is multi-pass bf16).
    precision = (lax.Precision.HIGHEST if dtype == jnp.float32
                 else lax.Precision.DEFAULT)

    f32_out = dtype == jnp.float32
    if f32_out:
        kernel = functools.partial(_matmul_bias_f32_kernel, precision=precision)
        scratch = []
    else:
        kernel = functools.partial(_matmul_bias_scratch_kernel,
                                   precision=precision)
        scratch = [pltpu.VMEM((tm, tn), jnp.float32)]

    itemsize = jnp.dtype(dtype).itemsize
    vmem_bytes = (2 * (tm * tk + tn * tk + tn) * itemsize   # double-buffered in
                  + 2 * tm * tn * itemsize                  # double-buffered out
                  + (0 if f32_out else tm * tn * 4))        # f32 scratch
    # Headroom, but capped at 48 MiB so the tiling also fits v7x's 64 MiB VMEM.
    vmem_limit = int(min(max(2 * vmem_bytes, 16 << 20), 48 << 20))

    grid = (mp // tm, np_ // tn, kp // tk)

    out = pl.pallas_call(
        kernel,
        out_shape=jax.ShapeDtypeStruct((mp, np_), dtype),
        grid_spec=pltpu.PrefetchScalarGridSpec(
            num_scalar_prefetch=0,
            grid=grid,
            in_specs=[
                pl.BlockSpec((tm, tk), lambda i, j, k: (i, k)),   # x
                pl.BlockSpec((tn, tk), lambda i, j, k: (j, k)),   # W (native layout)
                pl.BlockSpec((1, tn), lambda i, j, k: (0, j)),    # bias row
            ],
            out_specs=pl.BlockSpec((tm, tn), lambda i, j, k: (i, j)),
            scratch_shapes=scratch,
        ),
        compiler_params=pltpu.CompilerParams(
            dimension_semantics=("parallel", "parallel", "arbitrary"),
            vmem_limit_bytes=vmem_limit,
        ),
    )(xp, wp, bp)

    if mp != n or np_ != out_f:
        out = out[:n, :out_f]
    return out


# ---------------------------------------------------------------------------
# Public entry point: forward of LR(input_size, output_size).
# ---------------------------------------------------------------------------
@jax.jit
def lr_forward(x, weight, bias):
    """pred = x @ W.T + b  (PyTorch nn.Linear forward)."""
    out_f, in_f = weight.shape
    if in_f == 1 and out_f == 1:
        return _lr_forward_scalar(x, weight, bias)
    return _lr_forward_general(x, weight, bias)


if __name__ == "__main__":
    key = jax.random.PRNGKey(0)
    keys = jax.random.split(key, 10)

    # --- Case 1: the exact LR shapes: x = randn(100, 1) * 10, LR(1, 1) ------
    N, IN_F, OUT_F = 100, 1, 1
    x = jax.random.normal(keys[0], (N, IN_F), dtype=jnp.float32) * 10.0
    bound = 1.0 / (IN_F ** 0.5)
    weight = jax.random.uniform(keys[1], (OUT_F, IN_F), minval=-bound,
                                maxval=bound, dtype=jnp.float32)
    bias = jax.random.uniform(keys[2], (OUT_F,), minval=-bound, maxval=bound,
                              dtype=jnp.float32)

    pred = jax.block_until_ready(lr_forward(x, weight, bias))
    ref = x @ weight.T + bias
    assert pred.shape == (N, OUT_F)
    assert jnp.allclose(pred, ref, atol=1e-5, rtol=1e-5)

    # --- Case 2: small general linear layer (no padding path) ---------------
    N2, IN2, OUT2 = 100, 64, 32
    x2 = jax.random.normal(keys[3], (N2, IN2), dtype=jnp.float32)
    b2d = 1.0 / (IN2 ** 0.5)
    w2 = jax.random.uniform(keys[4], (OUT2, IN2), minval=-b2d, maxval=b2d,
                            dtype=jnp.float32)
    b2 = jax.random.uniform(keys[5], (OUT2,), minval=-b2d, maxval=b2d,
                            dtype=jnp.float32)

    pred2 = jax.block_until_ready(lr_forward(x2, w2, b2))
    ref2 = jnp.dot(x2, w2.T, precision=lax.Precision.HIGHEST) + b2
    assert pred2.shape == (N2, OUT2)
    assert jnp.allclose(pred2, ref2, rtol=1e-4, atol=1e-4)

    # --- Case 3: large-batch scalar path (exercises the pipelined 1-D grid) -
    N3 = 300_000
    x3 = jax.random.normal(keys[6], (N3, 1), dtype=jnp.float32) * 10.0
    pred3 = jax.block_until_ready(lr_forward(x3, weight, bias))
    ref3 = x3 @ weight.T + bias
    assert pred3.shape == (N3, 1)
    assert jnp.allclose(pred3, ref3, atol=1e-5, rtol=1e-5)

    # --- Case 4: K > tile cap (exercises K-axis accumulation + zero-pad) ----
    N4, IN4, OUT4 = 200, 768, 96
    x4 = jax.random.normal(keys[7], (N4, IN4), dtype=jnp.float32)
    b4d = 1.0 / (IN4 ** 0.5)
    w4 = jax.random.uniform(keys[8], (OUT4, IN4), minval=-b4d, maxval=b4d,
                            dtype=jnp.float32)
    b4 = jax.random.uniform(keys[9], (OUT4,), minval=-b4d, maxval=b4d,
                            dtype=jnp.float32)
    pred4 = jax.block_until_ready(lr_forward(x4, w4, b4))
    ref4 = jnp.dot(x4, w4.T, precision=lax.Precision.HIGHEST) + b4
    assert pred4.shape == (N4, OUT4)
    assert jnp.allclose(pred4, ref4, rtol=1e-4, atol=1e-4)

    print("KERNEL_OK")
</pallas_src>

<mosaic_0001>
module attributes {stable_mosaic.version = 11 : i64} {
  func.func @_lr_scalar_kernel(%arg0: i32, %arg1: memref<1x1xf32, #tpu.memory_space<smem>>, %arg2: memref<1x1xf32, #tpu.memory_space<smem>>, %arg3: memref<8x512xf32, #tpu.memory_space<vmem>>, %arg4: memref<8x512xf32, #tpu.memory_space<vmem>>) attributes {dimension_semantics = [#tpu.dimension_semantics<parallel>], iteration_bounds = array<i64: 1>, scalar_prefetch = 0 : i64, scratch_operands = 0 : i64, tpu.core_type = #tpu.core_type<tc>, window_params = [{transform_indices = @transform_0, window_bounds = array<i64: 1, 1>}, {transform_indices = @transform_1, window_bounds = array<i64: 1, 1>}, {transform_indices = @transform_2, window_bounds = array<i64: 8, 512>}, {transform_indices = @transform_3, window_bounds = array<i64: 8, 512>}]} {
    %c0 = arith.constant 0 : index
    %c0_0 = arith.constant 0 : index
    %0 = vector.load %arg3[%c0, %c0_0] : memref<8x512xf32, #tpu.memory_space<vmem>>, vector<8x512xf32>
    %c0_1 = arith.constant 0 : index
    %c0_2 = arith.constant 0 : index
    %1 = memref.load %arg1[%c0_1, %c0_2] : memref<1x1xf32, #tpu.memory_space<smem>>
    %2 = vector.broadcast %1 : f32 to vector<8x512xf32>
    %3 = arith.mulf %0, %2 : vector<8x512xf32>
    %c0_3 = arith.constant 0 : index
    %c0_4 = arith.constant 0 : index
    %4 = memref.load %arg2[%c0_3, %c0_4] : memref<1x1xf32, #tpu.memory_space<smem>>
    %5 = vector.broadcast %4 : f32 to vector<8x512xf32>
    %6 = arith.addf %3, %5 : vector<8x512xf32>
    %c0_5 = arith.constant 0 : index
    %c0_6 = arith.constant 0 : index
    %7 = vector.load %arg4[%c0_5, %c0_6] : memref<8x512xf32, #tpu.memory_space<vmem>>, vector<8x512xf32>
    tpu.vector_store %arg4[%c0_5, %c0_6], %6 {strides = array<i32>} : memref<8x512xf32, #tpu.memory_space<vmem>>, vector<8x512xf32>,
    return
  }
  func.func @transform_0(%arg0: i32) -> (i32, i32) {
    %c0_i32 = arith.constant 0 : i32
    %c0_i32_0 = arith.constant 0 : i32
    %c0_i32_1 = arith.constant 0 : i32
    return %c0_i32, %c0_i32_0 : i32, i32
  }
  func.func @transform_1(%arg0: i32) -> (i32, i32) {
    %c0_i32 = arith.constant 0 : i32
    %c0_i32_0 = arith.constant 0 : i32
    %c0_i32_1 = arith.constant 0 : i32
    return %c0_i32, %c0_i32_0 : i32, i32
  }
  func.func @transform_2(%arg0: i32) -> (i32, i32) {
    %c0_i32 = arith.constant 0 : i32
    %c0_i32_0 = arith.constant 0 : i32
    return %arg0, %c0_i32 : i32, i32
  }
  func.func @transform_3(%arg0: i32) -> (i32, i32) {
    %c0_i32 = arith.constant 0 : i32
    %c0_i32_0 = arith.constant 0 : i32
    return %arg0, %c0_i32 : i32, i32
  }
}

</mosaic_0001>

<llo_original>
// kernel: lr_forward.1
$region0: #{lr_forward.1}
  #allocation0 [shape = 'u32[]', space=smem, size = 0x4, offset = 0x4, fixed_abs, tag = 'smem constant byte address 0x4 - core index']
  #allocation1 [shape = 'u32[144,128]{1,0:T(1,128)}', space=vmem, size = 0x12000, scoped, tag = 'internal scratch']
  #allocation2 [shape = 'f32[1,1]{1,0:T(1,128)S(6)}', space=smem, size = 0x200, scoped, tag = 'scoped memory for lr_forward.1']
  #allocation3 [shape = 'f32[1,1]{1,0:T(1,128)S(6)}', space=smem, size = 0x200, scoped, tag = 'scoped memory for lr_forward.1']
  %s0 = inlined_call_operand.<no memory space> [shape: f32[1,1], index: 0, kind: input, shape index: {}]
  %s1 = inlined_call_operand.<no memory space> [shape: f32[1,1], index: 1, kind: input, shape index: {}]
  %s2 = inlined_call_operand.vmem [shape: f32[8,512], index: 2, kind: input, shape index: {}]
  %s3 = inlined_call_operand.vmem [shape: f32[8,512], index: 3, kind: output, shape index: {}]
  %s4 = sld [smem:[#allocation0]]
  $region22: #{lr_forward.1} parent=0
    _
  %s6 = ssub.s32 1, %s4
  %s7 = scalar_select 0, %s6, %s4
  %8 = sst [smem:[#allocation2]] %s0
  %9 = sst [smem:[#allocation3]] %s1
  // Predicated region
  $region2: #{lr_forward.1} parent=0 // pred_check
    _
  $region3: #{lr_forward.1} parent=0 // pred_check_branch
    %11 = sbr.rel (0) target = $region5
  $region4: #{lr_forward.1} parent=0 // pred_region
    _
  $region5: #{lr_forward.1} parent=0 // pred_fallthru
    _
  // Predicated region
  $region6: #{lr_forward.1} parent=0 // pred_check
    _
  $region7: #{lr_forward.1} parent=0 // pred_check_branch
    %13 = sbr.rel (0) target = $region9
  $region8: #{lr_forward.1} parent=0 // pred_region
    _
  $region9: #{lr_forward.1} parent=0 // pred_fallthru
    _
  // Predicated region
  $region10: #{lr_forward.1} parent=0 // pred_check
    _
  $region11: #{lr_forward.1} parent=0 // pred_check_branch
    %15 = sbr.rel (0) target = $region13
  $region12: #{lr_forward.1} parent=0 // pred_region
    _
  $region13: #{lr_forward.1} parent=0 // pred_fallthru
    _
  %v16 = vld [vmem:[%s2] sm:$0xff]
  %v17 = vld [vmem:[%s2 + $0x8] sm:$0xff]
  %v18 = vld [vmem:[%s2 + $0x10] sm:$0xff]
  %v19 = vld [vmem:[%s2 + $0x18] sm:$0xff]
  %s20 = sld [smem:[#allocation2]]
  %v21 = vstv %s20
  %v22 = vmul.f32 %v16, %v21
  %v23 = vmul.f32 %v17, %v21
  %v24 = vmul.f32 %v18, %v21
  %v25 = vmul.f32 %v19, %v21
  %s26 = sld [smem:[#allocation3]]
  %v27 = vstv %s26
  %v28 = vadd.f32 %v22, %v27
  %v29 = vadd.f32 %v23, %v27
  %v30 = vadd.f32 %v24, %v27
  %v31 = vadd.f32 %v25, %v27
  %32 = vst [vmem:[%s3] sm:$0xff] %v28
  %33 = vst [vmem:[%s3 + $0x8] sm:$0xff] %v29
  %34 = vst [vmem:[%s3 + $0x10] sm:$0xff] %v30
  %35 = vst [vmem:[%s3 + $0x18] sm:$0xff] %v31
  // Predicated region
  $region14: #{lr_forward.1} parent=0 // pred_check
    _
  $region15: #{lr_forward.1} parent=0 // pred_check_branch
    %37 = sbr.rel (0) target = $region17
  $region16: #{lr_forward.1} parent=0 // pred_region
    _
  $region17: #{lr_forward.1} parent=0 // pred_fallthru
    _
  // Predicated region
  $region18: #{lr_forward.1} parent=0 // pred_check
    _
  $region19: #{lr_forward.1} parent=0 // pred_check_branch
    %39 = sbr.rel (0) target = $region21
  $region20: #{lr_forward.1} parent=0 // pred_region
    _
  $region21: #{lr_forward.1} parent=0 // pred_fallthru
    _

</llo_original>
